<compile_context>
chip_gen: v6e
topology: v6e:2x2x1
jax: 0.10.0
libtpu: 0.0.40
codegen_flags: <defaults>
</compile_context>

<pallas_src>
import functools

import jax
import jax.numpy as jnp
from jax import lax
from jax.experimental import pallas as pl
from jax.experimental.pallas import tpu as pltpu

_LN_EPS = 1e-5                  # torch.nn.LayerNorm default
_INV_SQRT2 = 0.7071067811865476


def _round_up(x, m):
    return (x + m - 1) // m * m


def _mlp_kernel(x_ref, g_ref, w1_ref, b1_ref, w2_ref, b2_ref, o_ref, *, d_actual):
    # --- LayerNorm (no affine) * (gamma + 1); statistics in f32 over the real D lanes ---
    x = x_ref[...].astype(jnp.float32)                       # (tm, Dp)
    inv_d = jnp.float32(1.0 / d_actual)
    mean = jnp.sum(x, axis=-1, keepdims=True) * inv_d        # padded lanes are zero
    xc = x - mean
    if x.shape[-1] != d_actual:                               # mask padded lanes out of var
        lane = lax.broadcasted_iota(jnp.int32, x.shape, dimension=1)
        xc = jnp.where(lane < d_actual, xc, 0.0)
    var = jnp.sum(xc * xc, axis=-1, keepdims=True) * inv_d
    xn = xc * lax.rsqrt(var + _LN_EPS)
    xn = xn * (g_ref[...].astype(jnp.float32) + 1.0)          # broadcast (1, Dp)

    # --- Linear(dim -> dim_hidden) + exact (erf) GELU -----------------------------------
    # Feed the MXU in the weights' native dtype (bf16 x bf16 -> f32 accumulate when the
    # caller supplies bf16 weights); never force an f32 up-cast of the operands.
    h = jnp.dot(xn.astype(w1_ref.dtype), w1_ref[...],
                preferred_element_type=jnp.float32)            # (tm, Hp), f32 acc
    h = h + b1_ref[...].astype(jnp.float32)
    h = 0.5 * h * (1.0 + lax.erf(h * _INV_SQRT2))              # nn.GELU() default (erf)

    # Dropout(0.2): identity in eval mode.

    # --- Linear(dim_hidden -> dim) -------------------------------------------------------
    out = jnp.dot(h.astype(w2_ref.dtype), w2_ref[...],
                  preferred_element_type=jnp.float32)          # (tm, Dp), f32 acc
    out = out + b2_ref[...].astype(jnp.float32)

    # Dropout(0.2): identity in eval mode.
    o_ref[...] = out.astype(o_ref.dtype)


@functools.partial(jax.jit, static_argnames=("block_rows",))
def mlp_forward(x, gamma, w1, b1, w2, b2, *, block_rows=256):
    """x: (B, N, D) -> (B, N, D).  w1: (D, H), b1: (H,), w2: (H, D), b2: (D,)."""
    B, N, D = x.shape
    H = w1.shape[1]
    M = B * N

    # Lane-dense padding of feature / hidden dims (multiples of 128).
    Dp = _round_up(D, 128)
    Hp = _round_up(H, 128)

    # Row tile: as large as requested but never larger than (padded) M; multiple of 16
    # covers both f32 (8-sublane) and bf16 (16-sublane) packing.
    tm = _round_up(max(16, min(block_rows, _round_up(M, 16))), 16)
    Mp = _round_up(M, tm)

    x2 = x.reshape(M, D)
    if (Mp, Dp) != (M, D):
        x2 = jnp.pad(x2, ((0, Mp - M), (0, Dp - D)))
    g2 = jnp.pad(gamma, (0, Dp - D)).reshape(1, Dp)
    w1p = jnp.pad(w1, ((0, Dp - D), (0, Hp - H)))
    b1p = jnp.pad(b1, (0, Hp - H)).reshape(1, Hp)
    w2p = jnp.pad(w2, ((0, Hp - H), (0, Dp - D)))
    b2p = jnp.pad(b2, (0, Dp - D)).reshape(1, Dp)

    grid = (Mp // tm,)

    x_bytes = jnp.dtype(x.dtype).itemsize
    w_bytes = jnp.dtype(w1.dtype).itemsize
    cost = pl.CostEstimate(
        flops=2 * Mp * (Dp * Hp + Hp * Dp),
        transcendentals=Mp * Hp,                     # erf in GELU
        bytes_accessed=(2 * Mp * Dp * x_bytes        # x in + out
                        + (Dp * Hp + Hp * Dp) * w_bytes
                        + (2 * Dp + Hp) * 4),
    )

    out = pl.pallas_call(
        functools.partial(_mlp_kernel, d_actual=D),
        out_shape=jax.ShapeDtypeStruct((Mp, Dp), x.dtype),
        grid_spec=pltpu.PrefetchScalarGridSpec(
            num_scalar_prefetch=0,
            grid=grid,
            in_specs=[
                pl.BlockSpec((tm, Dp), lambda i: (i, 0)),   # x tile (pipelined over rows)
                pl.BlockSpec((1, Dp), lambda i: (0, 0)),    # gamma  (resident)
                pl.BlockSpec((Dp, Hp), lambda i: (0, 0)),   # W1     (resident)
                pl.BlockSpec((1, Hp), lambda i: (0, 0)),    # b1     (resident)
                pl.BlockSpec((Hp, Dp), lambda i: (0, 0)),   # W2     (resident)
                pl.BlockSpec((1, Dp), lambda i: (0, 0)),    # b2     (resident)
            ],
            out_specs=pl.BlockSpec((tm, Dp), lambda i: (i, 0)),
        ),
        compiler_params=pltpu.CompilerParams(
            dimension_semantics=("parallel",),
            # Raise the scoped-VMEM budget (default 16/32 MiB) so a big row tile plus
            # resident weights fit; 64 MiB is within physical VMEM on v5e/v6e/v7x.
            vmem_limit_bytes=64 * 1024 * 1024,
        ),
        cost_estimate=cost,
    )(x2, g2, w1p, b1p, w2p, b2p)

    return out[:M, :D].reshape(B, N, D)


def _reference(x, gamma, w1, b1, w2, b2):
    xf = x.astype(jnp.float32)
    mean = jnp.mean(xf, axis=-1, keepdims=True)
    var = jnp.mean((xf - mean) ** 2, axis=-1, keepdims=True)
    xn = (xf - mean) * lax.rsqrt(var + _LN_EPS)
    xn = xn * (gamma.astype(jnp.float32) + 1.0)
    h = xn @ w1.astype(jnp.float32) + b1.astype(jnp.float32)
    h = 0.5 * h * (1.0 + lax.erf(h * _INV_SQRT2))
    return (h @ w2.astype(jnp.float32) + b2.astype(jnp.float32)).astype(x.dtype)


if __name__ == "__main__":
    # Small shapes consistent with the module: tokens of dim D, hidden H.
    B, N, D, H = 2, 8, 32, 64

    key = jax.random.PRNGKey(0)
    kx, kw1, kb1, kw2, kb2 = jax.random.split(key, 5)

    x = jax.random.normal(kx, (B, N, D), dtype=jnp.float32)

    # Deterministic parameter init (shapes from MLP.__init__).
    gamma = jnp.zeros((D,), jnp.float32)                     # LayerNorm.gamma init zeros
    w1 = jax.random.normal(kw1, (D, H), jnp.float32) * 0.02  # Linear(dim, dim_hidden).weight.T
    b1 = jax.random.normal(kb1, (H,), jnp.float32) * 0.02
    w2 = jax.random.normal(kw2, (H, D), jnp.float32) * 0.02  # Linear(dim_hidden, dim).weight.T
    b2 = jax.random.normal(kb2, (D,), jnp.float32) * 0.02

    out = mlp_forward(x, gamma, w1, b1, w2, b2)
    jax.block_until_ready(out)

    ref = _reference(x, gamma, w1, b1, w2, b2)
    assert out.shape == (B, N, D)
    assert jnp.allclose(out, ref, atol=2e-5, rtol=2e-5), float(jnp.max(jnp.abs(out - ref)))

    # TODO(synk): Dropout(p=0.2) is modeled as eval-mode identity; a training-mode
    # variant would use pltpu.prng_seed + pltpu.prng_random_bits for the mask.
    print("KERNEL_OK")
</pallas_src>

<mosaic_0001>
module attributes {stable_mosaic.version = 11 : i64} {
  func.func @_mlp_kernel(%arg0: i32, %arg1: memref<16x128xf32, #tpu.memory_space<vmem>>, %arg2: memref<1x128xf32, #tpu.memory_space<vmem>>, %arg3: memref<128x128xf32, #tpu.memory_space<vmem>>, %arg4: memref<1x128xf32, #tpu.memory_space<vmem>>, %arg5: memref<128x128xf32, #tpu.memory_space<vmem>>, %arg6: memref<1x128xf32, #tpu.memory_space<vmem>>, %arg7: memref<16x128xf32, #tpu.memory_space<vmem>>) attributes {dimension_semantics = [#tpu.dimension_semantics<parallel>], iteration_bounds = array<i64: 1>, scalar_prefetch = 0 : i64, scratch_operands = 0 : i64, tpu.core_type = #tpu.core_type<tc>, window_params = [{transform_indices = @transform_0, window_bounds = array<i64: 16, 128>}, {pipeline_mode = #tpu.pipeline_mode<synchronous>, transform_indices = @transform_1, window_bounds = array<i64: 1, 128>}, {pipeline_mode = #tpu.pipeline_mode<synchronous>, transform_indices = @transform_2, window_bounds = array<i64: 128, 128>}, {pipeline_mode = #tpu.pipeline_mode<synchronous>, transform_indices = @transform_3, window_bounds = array<i64: 1, 128>}, {pipeline_mode = #tpu.pipeline_mode<synchronous>, transform_indices = @transform_4, window_bounds = array<i64: 128, 128>}, {pipeline_mode = #tpu.pipeline_mode<synchronous>, transform_indices = @transform_5, window_bounds = array<i64: 1, 128>}, {transform_indices = @transform_6, window_bounds = array<i64: 16, 128>}]} {
    %c0 = arith.constant 0 : index
    %c0_0 = arith.constant 0 : index
    %0 = vector.load %arg1[%c0, %c0_0] : memref<16x128xf32, #tpu.memory_space<vmem>>, vector<16x128xf32>
    %cst = arith.constant dense<0.000000e+00> : vector<16xf32>
    %1 = vector.multi_reduction <add>, %0, %cst [1] : vector<16x128xf32> to vector<16xf32>
    %2 = vector.shape_cast %1 : vector<16xf32> to vector<16x1xf32>
    %cst_1 = arith.constant 3.125000e-02 : f32
    %3 = vector.broadcast %cst_1 : f32 to vector<16x1xf32>
    %4 = arith.mulf %2, %3 : vector<16x1xf32>
    %5 = vector.broadcast %4 : vector<16x1xf32> to vector<16x128xf32>
    %6 = arith.subf %0, %5 : vector<16x128xf32>
    %7 = tpu.iota {dimensions = array<i32: 1>} : vector<16x128xi32>
    %c32_i32 = arith.constant 32 : i32
    %8 = vector.broadcast %c32_i32 : i32 to vector<16x128xi32>
    %9 = arith.cmpi slt, %7, %8 : vector<16x128xi32>
    %cst_2 = arith.constant 0.000000e+00 : f32
    %10 = vector.broadcast %cst_2 : f32 to vector<16x128xf32>
    %11 = arith.select %9, %6, %10 : vector<16x128xi1>, vector<16x128xf32>
    %12 = arith.mulf %11, %11 : vector<16x128xf32>
    %cst_3 = arith.constant dense<0.000000e+00> : vector<16xf32>
    %13 = vector.multi_reduction <add>, %12, %cst_3 [1] : vector<16x128xf32> to vector<16xf32>
    %14 = vector.shape_cast %13 : vector<16xf32> to vector<16x1xf32>
    %cst_4 = arith.constant 3.125000e-02 : f32
    %15 = vector.broadcast %cst_4 : f32 to vector<16x1xf32>
    %16 = arith.mulf %14, %15 : vector<16x1xf32>
    %cst_5 = arith.constant 9.99999974E-6 : f32
    %17 = vector.broadcast %cst_5 : f32 to vector<16x1xf32>
    %18 = arith.addf %16, %17 : vector<16x1xf32>
    %19 = math.rsqrt %18 : vector<16x1xf32>
    %20 = vector.broadcast %19 : vector<16x1xf32> to vector<16x128xf32>
    %21 = arith.mulf %11, %20 : vector<16x128xf32>
    %c0_6 = arith.constant 0 : index
    %c0_7 = arith.constant 0 : index
    %22 = vector.load %arg2[%c0_6, %c0_7] : memref<1x128xf32, #tpu.memory_space<vmem>>, vector<1x128xf32>
    %cst_8 = arith.constant 1.000000e+00 : f32
    %23 = vector.broadcast %cst_8 : f32 to vector<1x128xf32>
    %24 = arith.addf %22, %23 : vector<1x128xf32>
    %25 = vector.broadcast %24 : vector<1x128xf32> to vector<16x128xf32>
    %26 = arith.mulf %21, %25 : vector<16x128xf32>
    %c0_9 = arith.constant 0 : index
    %c0_10 = arith.constant 0 : index
    %27 = vector.load %arg3[%c0_9, %c0_10] : memref<128x128xf32, #tpu.memory_space<vmem>>, vector<128x128xf32>
    %cst_11 = arith.constant dense<0.000000e+00> : vector<16x128xf32>
    %28 = tpu.matmul %26, %27, %cst_11 {dimension_numbers = #tpu.dot_dimension_numbers<[1], [0], [0], [1], [0, 0, 1, 1], [], []>} : vector<16x128xf32>, vector<128x128xf32>, vector<16x128xf32> -> vector<16x128xf32>
    %c0_12 = arith.constant 0 : index
    %c0_13 = arith.constant 0 : index
    %29 = vector.load %arg4[%c0_12, %c0_13] : memref<1x128xf32, #tpu.memory_space<vmem>>, vector<1x128xf32>
    %30 = vector.broadcast %29 : vector<1x128xf32> to vector<16x128xf32>
    %31 = arith.addf %28, %30 : vector<16x128xf32>
    %cst_14 = arith.constant 5.000000e-01 : f32
    %32 = vector.broadcast %cst_14 : f32 to vector<16x128xf32>
    %33 = arith.mulf %32, %31 : vector<16x128xf32>
    %cst_15 = arith.constant 0.707106769 : f32
    %34 = vector.broadcast %cst_15 : f32 to vector<16x128xf32>
    %35 = arith.mulf %31, %34 : vector<16x128xf32>
    %36 = math.erf %35 : vector<16x128xf32>
    %cst_16 = arith.constant 1.000000e+00 : f32
    %37 = vector.broadcast %cst_16 : f32 to vector<16x128xf32>
    %38 = arith.addf %37, %36 : vector<16x128xf32>
    %39 = arith.mulf %33, %38 : vector<16x128xf32>
    %c0_17 = arith.constant 0 : index
    %c0_18 = arith.constant 0 : index
    %40 = vector.load %arg5[%c0_17, %c0_18] : memref<128x128xf32, #tpu.memory_space<vmem>>, vector<128x128xf32>
    %cst_19 = arith.constant dense<0.000000e+00> : vector<16x128xf32>
    %41 = tpu.matmul %39, %40, %cst_19 {dimension_numbers = #tpu.dot_dimension_numbers<[1], [0], [0], [1], [0, 0, 1, 1], [], []>} : vector<16x128xf32>, vector<128x128xf32>, vector<16x128xf32> -> vector<16x128xf32>
    %c0_20 = arith.constant 0 : index
    %c0_21 = arith.constant 0 : index
    %42 = vector.load %arg6[%c0_20, %c0_21] : memref<1x128xf32, #tpu.memory_space<vmem>>, vector<1x128xf32>
    %43 = vector.broadcast %42 : vector<1x128xf32> to vector<16x128xf32>
    %44 = arith.addf %41, %43 : vector<16x128xf32>
    %c0_22 = arith.constant 0 : index
    %c0_23 = arith.constant 0 : index
    %45 = vector.load %arg7[%c0_22, %c0_23] : memref<16x128xf32, #tpu.memory_space<vmem>>, vector<16x128xf32>
    tpu.vector_store %arg7[%c0_22, %c0_23], %44 {strides = array<i32>} : memref<16x128xf32, #tpu.memory_space<vmem>>, vector<16x128xf32>,
    return
  }
  func.func @transform_0(%arg0: i32) -> (i32, i32) {
    %c0_i32 = arith.constant 0 : i32
    %c0_i32_0 = arith.constant 0 : i32
    return %arg0, %c0_i32 : i32, i32
  }
  func.func @transform_1(%arg0: i32) -> (i32, i32) {
    %c0_i32 = arith.constant 0 : i32
    %c0_i32_0 = arith.constant 0 : i32
    %c0_i32_1 = arith.constant 0 : i32
    return %c0_i32, %c0_i32_0 : i32, i32
  }
  func.func @transform_2(%arg0: i32) -> (i32, i32) {
    %c0_i32 = arith.constant 0 : i32
    %c0_i32_0 = arith.constant 0 : i32
    %c0_i32_1 = arith.constant 0 : i32
    return %c0_i32, %c0_i32_0 : i32, i32
  }
  func.func @transform_3(%arg0: i32) -> (i32, i32) {
    %c0_i32 = arith.constant 0 : i32
    %c0_i32_0 = arith.constant 0 : i32
    %c0_i32_1 = arith.constant 0 : i32
    return %c0_i32, %c0_i32_0 : i32, i32
  }
  func.func @transform_4(%arg0: i32) -> (i32, i32) {
    %c0_i32 = arith.constant 0 : i32
    %c0_i32_0 = arith.constant 0 : i32
    %c0_i32_1 = arith.constant 0 : i32
    return %c0_i32, %c0_i32_0 : i32, i32
  }
  func.func @transform_5(%arg0: i32) -> (i32, i32) {
    %c0_i32 = arith.constant 0 : i32
    %c0_i32_0 = arith.constant 0 : i32
    %c0_i32_1 = arith.constant 0 : i32
    return %c0_i32, %c0_i32_0 : i32, i32
  }
  func.func @transform_6(%arg0: i32) -> (i32, i32) {
    %c0_i32 = arith.constant 0 : i32
    %c0_i32_0 = arith.constant 0 : i32
    return %arg0, %c0_i32 : i32, i32
  }
}

</mosaic_0001>

<llo_original>
// kernel: mlp_forward.1
$region0: #{mlp_forward.1}
  #allocation0 [shape = 'u32[]', space=smem, size = 0x4, offset = 0x4, fixed_abs, tag = 'smem constant byte address 0x4 - core index']
  #allocation1 [shape = 'u32[144,128]{1,0:T(1,128)}', space=vmem, size = 0x12000, scoped, tag = 'internal scratch']
  %s0 = inlined_call_operand.vmem [shape: f32[16,128], index: 0, kind: input, shape index: {}]
  %s1 = inlined_call_operand.vmem [shape: f32[1,128], index: 1, kind: input, shape index: {}]
  %s2 = inlined_call_operand.vmem [shape: f32[128,128], index: 2, kind: input, shape index: {}]
  %s3 = inlined_call_operand.vmem [shape: f32[1,128], index: 3, kind: input, shape index: {}]
  %s4 = inlined_call_operand.vmem [shape: f32[128,128], index: 4, kind: input, shape index: {}]
  %s5 = inlined_call_operand.vmem [shape: f32[1,128], index: 5, kind: input, shape index: {}]
  %s6 = inlined_call_operand.vmem [shape: f32[16,128], index: 6, kind: output, shape index: {}]
  %s7 = sld [smem:[#allocation0]]
  $region34: #{mlp_forward.1} parent=0
    _
  %s9 = ssub.s32 1, %s7
  %s10 = scalar_select 0, %s9, %s7
  // Predicated region
  $region2: #{mlp_forward.1} parent=0 // pred_check
    _
  $region3: #{mlp_forward.1} parent=0 // pred_check_branch
    %12 = sbr.rel (0) target = $region5
  $region4: #{mlp_forward.1} parent=0 // pred_region
    _
  $region5: #{mlp_forward.1} parent=0 // pred_fallthru
    _
  // Predicated region
  $region6: #{mlp_forward.1} parent=0 // pred_check
    _
  $region7: #{mlp_forward.1} parent=0 // pred_check_branch
    %14 = sbr.rel (0) target = $region9
  $region8: #{mlp_forward.1} parent=0 // pred_region
    _
  $region9: #{mlp_forward.1} parent=0 // pred_fallthru
    _
  // Predicated region
  $region10: #{mlp_forward.1} parent=0 // pred_check
    _
  $region11: #{mlp_forward.1} parent=0 // pred_check_branch
    %16 = sbr.rel (0) target = $region13
  $region12: #{mlp_forward.1} parent=0 // pred_region
    _
  $region13: #{mlp_forward.1} parent=0 // pred_fallthru
    _
  // Predicated region
  $region14: #{mlp_forward.1} parent=0 // pred_check
    _
  $region15: #{mlp_forward.1} parent=0 // pred_check_branch
    %18 = sbr.rel (0) target = $region17
  $region16: #{mlp_forward.1} parent=0 // pred_region
    _
  $region17: #{mlp_forward.1} parent=0 // pred_fallthru
    _
  // Predicated region
  $region18: #{mlp_forward.1} parent=0 // pred_check
    _
  $region19: #{mlp_forward.1} parent=0 // pred_check_branch
    %20 = sbr.rel (0) target = $region21
  $region20: #{mlp_forward.1} parent=0 // pred_region
    _
  $region21: #{mlp_forward.1} parent=0 // pred_fallthru
    _
  // Predicated region
  $region22: #{mlp_forward.1} parent=0 // pred_check
    _
  $region23: #{mlp_forward.1} parent=0 // pred_check_branch
    %22 = sbr.rel (0) target = $region25
  $region24: #{mlp_forward.1} parent=0 // pred_region
    _
  $region25: #{mlp_forward.1} parent=0 // pred_fallthru
    _
  %v23 = vld [vmem:[%s0] sm:$0xff]
  %v24 = vld [vmem:[%s0 + $0x8] sm:$0xff]
  %25 = vadd.xlane.f32.xlu0 %v23
  %v26 = vpop.xlane.xlu0 %25
  %27 = vadd.xlane.f32.xlu0 %v24
  %v28 = vpop.xlane.xlu0 %27
  %v29 = vmul.f32 %v26, 0.03125
  %v30 = vmul.f32 %v28, 0.03125
  %v31 = vsub.f32 %v23, %v29
  %v32 = vsub.f32 %v24, %v30
  %v33 = vlaneseq
  %v34 = vand.u32 %v33, 127
  %vm35 = vcmp.lt.s32.totalorder %v34, 32
  %v36 = vsel %vm35, %v31, 0.0
  %v37 = vsel %vm35, %v32, 0.0
  %v38 = vmul.f32 %v36, %v36
  %v39 = vmul.f32 %v37, %v37
  %40 = vadd.xlane.f32.xlu0 %v38
  %v41 = vpop.xlane.xlu0 %40
  %42 = vadd.xlane.f32.xlu0 %v39
  %v43 = vpop.xlane.xlu0 %42
  %v44 = vmul.f32 %v41, 0.03125
  %v45 = vmul.f32 %v43, 0.03125
  %v46 = vadd.f32 %v44, 1e-05
  %v47 = vadd.f32 %v45, 1e-05
  %v48 = vrsqrt.pop %v46
  %v49 = vrsqrt.pop %v47
  %v50 = vmul.f32 %v36, %v48
  %v51 = vmul.f32 %v37, %v49
  %v52 = vld [vmem:[%s1] sm:$0x1]
  %v53 = vadd.f32 %v52, 1.0
  %v55 = vlaneseq
  %v56 = vshrl.u32 %v55, 7
  %v57 = vsub.s32 0, %v56
  %v58 = vrot.slane %v53, %v57
  %v60 = vmul.f32 %v50, %v58
  %v61 = vmul.f32 %v51, %v58
  %v62 = vld [vmem:[%s2] sm:$0xff]
  %v63 = vld [vmem:[%s2 + $0x8] sm:$0xff]
  %v64 = vld [vmem:[%s2 + $0x10] sm:$0xff]
  %v65 = vld [vmem:[%s2 + $0x18] sm:$0xff]
  %v66 = vld [vmem:[%s2 + $0x20] sm:$0xff]
  %v67 = vld [vmem:[%s2 + $0x28] sm:$0xff]
  %v68 = vld [vmem:[%s2 + $0x30] sm:$0xff]
  %v69 = vld [vmem:[%s2 + $0x38] sm:$0xff]
  %v70 = vld [vmem:[%s2 + $0x40] sm:$0xff]
  %v71 = vld [vmem:[%s2 + $0x48] sm:$0xff]
  %v72 = vld [vmem:[%s2 + $0x50] sm:$0xff]
  %v73 = vld [vmem:[%s2 + $0x58] sm:$0xff]
  %v74 = vld [vmem:[%s2 + $0x60] sm:$0xff]
  %v75 = vld [vmem:[%s2 + $0x68] sm:$0xff]
  %v76 = vld [vmem:[%s2 + $0x70] sm:$0xff]
  %v77 = vld [vmem:[%s2 + $0x78] sm:$0xff]
  %v78 = vld [vmem:[%s3] sm:$0x1]
  %v80 = vlaneseq
  %v81 = vshrl.u32 %v80, 7
  %v82 = vsub.s32 0, %v81
  %v83 = vrot.slane %v78, %v82
  %85 = vmatprep.subr.mxu0 0.0
  %86 = vmatpush1.msra.mxu0 %v77
  %87 = vmatprep.subr.mxu0 0.0
  %88 = vmatpush1.msra.mxu0 %v76
  %89 = vmatprep.subr.mxu0 0.0
  %90 = vmatpush1.msra.mxu0 %v75
  %91 = vmatprep.subr.mxu0 0.0
  %92 = vmatpush1.msra.mxu0 %v74
  %93 = vmatprep.subr.mxu0 0.0
  %94 = vmatpush1.msra.mxu0 %v73
  %95 = vmatprep.subr.mxu0 0.0
  %96 = vmatpush1.msra.mxu0 %v72
  %97 = vmatprep.subr.mxu0 0.0
  %98 = vmatpush1.msra.mxu0 %v71
  %99 = vmatprep.subr.mxu0 0.0
  %100 = vmatpush1.msra.mxu0 %v70
  %101 = vmatprep.subr.mxu0 0.0
  %102 = vmatpush1.msra.mxu0 %v69
  %103 = vmatprep.subr.mxu0 0.0
  %104 = vmatpush1.msra.mxu0 %v68
  %105 = vmatprep.subr.mxu0 0.0
  %106 = vmatpush1.msra.mxu0 %v67
  %107 = vmatprep.subr.mxu0 0.0
  %108 = vmatpush1.msra.mxu0 %v66
  %109 = vmatprep.subr.mxu0 0.0
  %110 = vmatpush1.msra.mxu0 %v65
  %111 = vmatprep.subr.mxu0 0.0
  %112 = vmatpush1.msra.mxu0 %v64
  %113 = vmatprep.subr.mxu0 0.0
  %114 = vmatpush1.msra.mxu0 %v63
  %115 = vmatprep.subr.mxu0 0.0
  %116 = vmatpush1.msra.mxu0 %v62
  %117 = vmatprep.subr.mxu0 0.0
  %118 = vmatpush2.msra.mxu0 0.0
  %119 = vmatprep.subr.mxu0 0.0
  %120 = vmatpush2.msra.mxu0 0.0
  %121 = vmatprep.subr.mxu0 0.0
  %122 = vmatpush2.msra.mxu0 0.0
  %123 = vmatprep.subr.mxu0 0.0
  %124 = vmatpush2.msra.mxu0 0.0
  %125 = vmatprep.subr.mxu0 0.0
  %126 = vmatpush2.msra.mxu0 0.0
  %127 = vmatprep.subr.mxu0 0.0
  %128 = vmatpush2.msra.mxu0 0.0
  %129 = vmatprep.subr.mxu0 0.0
  %130 = vmatpush2.msra.mxu0 0.0
  %131 = vmatprep.subr.mxu0 0.0
  %132 = vmatpush2.msra.mxu0 0.0
  %133 = vmatprep.subr.mxu0 0.0
  %134 = vmatpush2.msra.mxu0 0.0
  %135 = vmatprep.subr.mxu0 0.0
  %136 = vmatpush2.msra.mxu0 0.0
  %137 = vmatprep.subr.mxu0 0.0
  %138 = vmatpush2.msra.mxu0 0.0
  %139 = vmatprep.subr.mxu0 0.0
  %140 = vmatpush2.msra.mxu0 0.0
  %141 = vmatprep.subr.mxu0 0.0
  %142 = vmatpush2.msra.mxu0 0.0
  %143 = vmatprep.subr.mxu0 0.0
  %144 = vmatpush2.msra.mxu0 0.0
  %145 = vmatprep.subr.mxu0 0.0
  %146 = vmatpush2.msra.mxu0 0.0
  %147 = vmatprep.subr.mxu0 0.0
  %148 = vmatpush2.msra.mxu0 0.0
  %149 = vmatprep.mubr.f32.mxu0 0.0
  %150 = vmatmul.mubr.f32.gmra.mxu0 %v60
  %v151 = vpop.f32.mrf.mxu0
  %v152 = vadd.f32 %v83, %v151
  %v153 = vpop.f32.mrf.mxu0
  %154 = vmatprep.mubr.f32.mxu0 0.0
  %155 = vmatmul.mubr.f32.gmra.mxu0 %v61
  %v156 = vpop.f32.mrf.mxu0
  %v157 = vadd.f32 %v83, %v156
  %v158 = vpop.f32.mrf.mxu0
  %159 = vdwg.mxu0
  %v160 = vmul.f32 %v152, 0.5
  %v161 = vmul.f32 %v157, 0.5
  %v162 = vmul.f32 %v152, 0.70710677
  %v163 = vmul.f32 %v157, 0.70710677
  %v164 = verf.f32.pop %v162
  %v165 = verf.f32.pop %v163
  %v166 = vadd.f32 %v164, 1.0
  %v167 = vadd.f32 %v165, 1.0
  %v168 = vmul.f32 %v160, %v166
  %v169 = vmul.f32 %v161, %v167
  %v170 = vld [vmem:[%s4] sm:$0xff]
  %v171 = vld [vmem:[%s4 + $0x8] sm:$0xff]
  %v172 = vld [vmem:[%s4 + $0x10] sm:$0xff]
  %v173 = vld [vmem:[%s4 + $0x18] sm:$0xff]
  %v174 = vld [vmem:[%s4 + $0x20] sm:$0xff]
  %v175 = vld [vmem:[%s4 + $0x28] sm:$0xff]
  %v176 = vld [vmem:[%s4 + $0x30] sm:$0xff]
  %v177 = vld [vmem:[%s4 + $0x38] sm:$0xff]
  %v178 = vld [vmem:[%s4 + $0x40] sm:$0xff]
  %v179 = vld [vmem:[%s4 + $0x48] sm:$0xff]
  %v180 = vld [vmem:[%s4 + $0x50] sm:$0xff]
  %v181 = vld [vmem:[%s4 + $0x58] sm:$0xff]
  %v182 = vld [vmem:[%s4 + $0x60] sm:$0xff]
  %v183 = vld [vmem:[%s4 + $0x68] sm:$0xff]
  %v184 = vld [vmem:[%s4 + $0x70] sm:$0xff]
  %v185 = vld [vmem:[%s4 + $0x78] sm:$0xff]
  %v186 = vld [vmem:[%s5] sm:$0x1]
  %v188 = vlaneseq
  %v189 = vshrl.u32 %v188, 7
  %v190 = vsub.s32 0, %v189
  %v191 = vrot.slane %v186, %v190
  %193 = vmatprep.subr.mxu0 0.0
  %194 = vmatpush1.msra.mxu0 %v185
  %195 = vmatprep.subr.mxu0 0.0
  %196 = vmatpush1.msra.mxu0 %v184
  %197 = vmatprep.subr.mxu0 0.0
  %198 = vmatpush1.msra.mxu0 %v183
  %199 = vmatprep.subr.mxu0 0.0
  %200 = vmatpush1.msra.mxu0 %v182
  %201 = vmatprep.subr.mxu0 0.0
  %202 = vmatpush1.msra.mxu0 %v181
  %203 = vmatprep.subr.mxu0 0.0
  %204 = vmatpush1.msra.mxu0 %v180
  %205 = vmatprep.subr.mxu0 0.0
  %206 = vmatpush1.msra.mxu0 %v179
  %207 = vmatprep.subr.mxu0 0.0
  %208 = vmatpush1.msra.mxu0 %v178
  %209 = vmatprep.subr.mxu0 0.0
  %210 = vmatpush1.msra.mxu0 %v177
  %211 = vmatprep.subr.mxu0 0.0
  %212 = vmatpush1.msra.mxu0 %v176
  %213 = vmatprep.subr.mxu0 0.0
  %214 = vmatpush1.msra.mxu0 %v175
  %215 = vmatprep.subr.mxu0 0.0
  %216 = vmatpush1.msra.mxu0 %v174
  %217 = vmatprep.subr.mxu0 0.0
  %218 = vmatpush1.msra.mxu0 %v173
  %219 = vmatprep.subr.mxu0 0.0
  %220 = vmatpush1.msra.mxu0 %v172
  %221 = vmatprep.subr.mxu0 0.0
  %222 = vmatpush1.msra.mxu0 %v171
  %223 = vmatprep.subr.mxu0 0.0
  %224 = vmatpush1.msra.mxu0 %v170
  %225 = vmatprep.subr.mxu0 0.0
  %226 = vmatpush2.msra.mxu0 0.0
  %227 = vmatprep.subr.mxu0 0.0
  %228 = vmatpush2.msra.mxu0 0.0
  %229 = vmatprep.subr.mxu0 0.0
  %230 = vmatpush2.msra.mxu0 0.0
  %231 = vmatprep.subr.mxu0 0.0
  %232 = vmatpush2.msra.mxu0 0.0
  %233 = vmatprep.subr.mxu0 0.0
  %234 = vmatpush2.msra.mxu0 0.0
  %235 = vmatprep.subr.mxu0 0.0
  %236 = vmatpush2.msra.mxu0 0.0
  %237 = vmatprep.subr.mxu0 0.0
  %238 = vmatpush2.msra.mxu0 0.0
  %239 = vmatprep.subr.mxu0 0.0
  %240 = vmatpush2.msra.mxu0 0.0
  %241 = vmatprep.subr.mxu0 0.0
  %242 = vmatpush2.msra.mxu0 0.0
  %243 = vmatprep.subr.mxu0 0.0
  %244 = vmatpush2.msra.mxu0 0.0
  %245 = vmatprep.subr.mxu0 0.0
  %246 = vmatpush2.msra.mxu0 0.0
  %247 = vmatprep.subr.mxu0 0.0
  %248 = vmatpush2.msra.mxu0 0.0
  %249 = vmatprep.subr.mxu0 0.0
  %250 = vmatpush2.msra.mxu0 0.0
  %251 = vmatprep.subr.mxu0 0.0
  %252 = vmatpush2.msra.mxu0 0.0
  %253 = vmatprep.subr.mxu0 0.0
  %254 = vmatpush2.msra.mxu0 0.0
  %255 = vmatprep.subr.mxu0 0.0
  %256 = vmatpush2.msra.mxu0 0.0
  %257 = vmatprep.mubr.f32.mxu0 0.0
  %258 = vmatmul.mubr.f32.gmra.mxu0 %v168
  %v259 = vpop.f32.mrf.mxu0
  %v260 = vadd.f32 %v191, %v259
  %v261 = vpop.f32.mrf.mxu0
  %262 = vmatprep.mubr.f32.mxu0 0.0
  %263 = vmatmul.mubr.f32.gmra.mxu0 %v169
  %v264 = vpop.f32.mrf.mxu0
  %v265 = vadd.f32 %v191, %v264
  %v266 = vpop.f32.mrf.mxu0
  %267 = vdwg.mxu0
  %268 = vst [vmem:[%s6] sm:$0xff] %v260
  %269 = vst [vmem:[%s6 + $0x8] sm:$0xff] %v265
  // Predicated region
  $region26: #{mlp_forward.1} parent=0 // pred_check
    _
  $region27: #{mlp_forward.1} parent=0 // pred_check_branch
    %271 = sbr.rel (0) target = $region29
  $region28: #{mlp_forward.1} parent=0 // pred_region
    _
  $region29: #{mlp_forward.1} parent=0 // pred_fallthru
    _
  // Predicated region
  $region30: #{mlp_forward.1} parent=0 // pred_check
    _
  $region31: #{mlp_forward.1} parent=0 // pred_check_branch
    %273 = sbr.rel (0) target = $region33
  $region32: #{mlp_forward.1} parent=0 // pred_region
    _
  $region33: #{mlp_forward.1} parent=0 // pred_fallthru
    _

</llo_original>
